<compile_context>
chip_gen: v5e
topology: v5e:2x2
jax: 0.10.0
libtpu: 0.0.40
codegen_flags: <defaults>
</compile_context>

<pallas_src>
import math

import jax
import jax.numpy as jnp
from jax.experimental import pallas as pl
from jax.experimental.pallas import tpu as pltpu


IN_DIM, HID_DIM, OUT_DIM = 6, 50, 3        # logical (torch) dims
HID_PAD, OUT_PAD = 128, 8                  # tile-aligned padded dims


def _round_up(n, m):
    return (n + m - 1) // m * m


def qnet_kernel(x_ref, w1_ref, b1_ref, w2_ref, b2_ref, w3_ref, b3_ref, o_ref):
    # x arrives as f32 (TB, 6); cast to bf16 for the MXU.
    x = x_ref[...].astype(jnp.bfloat16)

    # fc1 + relu  (bf16 MXU inputs, f32 accumulate, f32 epilogue)
    h1 = jnp.dot(x, w1_ref[...], preferred_element_type=jnp.float32) + b1_ref[...]
    x1 = jnp.maximum(h1, 0.0)                                       # (TB, 128) f32

    # fc2 + relu
    h2 = jnp.dot(x1.astype(jnp.bfloat16), w2_ref[...],
                 preferred_element_type=jnp.float32) + b2_ref[...]
    x2 = jnp.maximum(h2, 0.0)

    # head on the residual sum (x2 + x1); narrow (TB, 8) store
    res = (x2 + x1).astype(jnp.bfloat16)
    out = jnp.dot(res, w3_ref[...], preferred_element_type=jnp.float32) + b3_ref[...]
    o_ref[...] = out.astype(o_ref.dtype)


def qnetwork_forward(x, padded_params, *, max_tile=4096):
    """x: [B, 6] float32 -> [B, 3] float32.  padded_params from prepare_params."""
    w1, b1, w2, b2, w3, b3 = padded_params
    B, F = x.shape
    assert F == IN_DIM

    # Batch tile: multiple of 8, large enough to amortize per-step overhead,
    # never bigger than needed for small B, and aiming for >= 2 grid steps on
    # mid/large batches so a v7x megacore can shard the "parallel" axis.
    tb = min(max_tile, max(8, _round_up(pl.cdiv(B, 2), 8)))
    b_pad = _round_up(B, tb)

    # Zero-pad the batch dim only (stays f32; cast happens in-kernel).  Done
    # inside the caller's jit so it fuses with surrounding ops.
    if b_pad != B:
        xp = jnp.zeros((b_pad, IN_DIM), x.dtype).at[:B, :].set(x)
    else:
        xp = x

    batch_spec = lambda width: pl.BlockSpec((tb, width), lambda i: (i, 0))
    resident = lambda shape: pl.BlockSpec(shape, lambda i: (0, 0))

    weight_bytes = sum(int(p.size) * p.dtype.itemsize
                       for p in (w1, b1, w2, b2, w3, b3))
    cost = pl.CostEstimate(
        flops=2 * b_pad * (IN_DIM * HID_PAD + HID_PAD * HID_PAD + HID_PAD * OUT_PAD),
        transcendentals=0,
        bytes_accessed=b_pad * IN_DIM * 4 + b_pad * OUT_PAD * 4 + weight_bytes,
    )

    out_padded = pl.pallas_call(
        qnet_kernel,
        out_shape=jax.ShapeDtypeStruct((b_pad, OUT_PAD), jnp.float32),
        grid=(pl.cdiv(b_pad, tb),),
        in_specs=[
            batch_spec(IN_DIM),                        # x: streamed per tile (f32, 6 wide)
            resident(w1.shape), resident(b1.shape),    # weights/biases resident in VMEM
            resident(w2.shape), resident(b2.shape),
            resident(w3.shape), resident(b3.shape),
        ],
        out_specs=batch_spec(OUT_PAD),                 # narrow (tb, 8) f32 output
        compiler_params=pltpu.CompilerParams(
            dimension_semantics=("parallel",)),        # megacore-shard batch (v7x)
        cost_estimate=cost,
    )(xp, w1, b1, w2, b2, w3, b3)

    return out_padded[:B, :OUT_DIM]


def init_params(key):
    """Unpadded f32 params mimicking nn.Linear default init (W stored [in,out])."""
    def linear(key, fan_in, fan_out):
        kw, kb = jax.random.split(key)
        bound = 1.0 / math.sqrt(fan_in)
        w = jax.random.uniform(kw, (fan_in, fan_out), jnp.float32, -bound, bound)
        b = jax.random.uniform(kb, (fan_out,), jnp.float32, -bound, bound)
        return w, b

    k1, k2, k3 = jax.random.split(key, 3)
    w1, b1 = linear(k1, IN_DIM, HID_DIM)
    w2, b2 = linear(k2, HID_DIM, HID_DIM)
    w3, b3 = linear(k3, HID_DIM, OUT_DIM)
    return (w1, b1, w2, b2, w3, b3)


def prepare_params(params):
    """One-time host-side zero-padding to tile-aligned shapes; weights -> bf16.

    Zero padding keeps the math exact: padded hidden lanes stay identically 0
    through relu and contribute nothing to downstream matmuls; padded output
    lanes are sliced off.
    """
    w1, b1, w2, b2, w3, b3 = params

    def pad_w(w, rows, cols):
        out = jnp.zeros((rows, cols), jnp.bfloat16)
        return out.at[: w.shape[0], : w.shape[1]].set(w.astype(jnp.bfloat16))

    def pad_b(b, cols):
        out = jnp.zeros((1, cols), jnp.float32)
        return out.at[0, : b.shape[0]].set(b)

    return (
        pad_w(w1, IN_DIM, HID_PAD),  pad_b(b1, HID_PAD),   # (6, 128),  (1, 128)
        pad_w(w2, HID_PAD, HID_PAD), pad_b(b2, HID_PAD),   # (128,128), (1, 128)
        pad_w(w3, HID_PAD, OUT_PAD), pad_b(b3, OUT_PAD),   # (128, 8),  (1, 8)
    )


def qnetwork_ref_f32(x, params):
    """Plain f32 reference matching the torch module's semantics."""
    w1, b1, w2, b2, w3, b3 = params
    x1 = jnp.maximum(x @ w1 + b1, 0.0)
    x2 = jnp.maximum(x1 @ w2 + b2, 0.0)
    return (x2 + x1) @ w3 + b3


def qnetwork_ref_kernel_numerics(x, params):
    """Same numerics as the kernel: bf16 matmul inputs, f32 accumulation."""
    w1, b1, w2, b2, w3, b3 = params
    bf = lambda a: a.astype(jnp.bfloat16)
    h1 = jnp.dot(bf(x), bf(w1), preferred_element_type=jnp.float32) + b1
    x1 = jnp.maximum(h1, 0.0)
    h2 = jnp.dot(bf(x1), bf(w2), preferred_element_type=jnp.float32) + b2
    x2 = jnp.maximum(h2, 0.0)
    return jnp.dot(bf(x2 + x1), bf(w3), preferred_element_type=jnp.float32) + b3


if __name__ == "__main__":
    key = jax.random.PRNGKey(0)
    kx, kx2, kp = jax.random.split(key, 3)

    params = init_params(kp)                 # unpadded f32 (for reference)
    padded_params = prepare_params(params)   # padded / bf16 (for the kernel)

    fwd = jax.jit(qnetwork_forward)          # pad + pallas_call + slice fused per-shape

    # --- small demo batch (feature dim is 6 per the module's fc1) ---
    B = 8
    x = jax.random.normal(kx, (B, IN_DIM), jnp.float32)
    out = jax.block_until_ready(fwd(x, padded_params))
    assert out.shape == (B, OUT_DIM)

    # Tight check against a reference emulating the kernel's bf16-input /
    # f32-accumulate matmuls.
    ref_exact = qnetwork_ref_kernel_numerics(x, params)
    assert jnp.allclose(out, ref_exact, atol=1e-3, rtol=1e-3), (
        float(jnp.max(jnp.abs(out - ref_exact))))

    # Loose check against the pure-f32 torch-equivalent forward (bf16 weight
    # rounding is the only difference).
    ref_f32 = qnetwork_ref_f32(x, params)
    assert jnp.allclose(out, ref_f32, atol=1e-1, rtol=1e-1), (
        float(jnp.max(jnp.abs(out - ref_f32))))

    # --- exercise the multi-step grid + batch-padding path (B=40 -> 2 tiles) ---
    B2 = 40
    x2 = jax.random.normal(kx2, (B2, IN_DIM), jnp.float32)
    out2 = jax.block_until_ready(fwd(x2, padded_params))
    assert out2.shape == (B2, OUT_DIM)
    ref2 = qnetwork_ref_kernel_numerics(x2, params)
    assert jnp.allclose(out2, ref2, atol=1e-3, rtol=1e-3), (
        float(jnp.max(jnp.abs(out2 - ref2))))

    print("KERNEL_OK")
</pallas_src>

<mosaic_0001>
module attributes {stable_mosaic.version = 11 : i64} {
  func.func @qnet_kernel(%arg0: i32, %arg1: memref<8x6xf32, #tpu.memory_space<vmem>>, %arg2: memref<6x128xbf16, #tpu.memory_space<vmem>>, %arg3: memref<1x128xf32, #tpu.memory_space<vmem>>, %arg4: memref<128x128xbf16, #tpu.memory_space<vmem>>, %arg5: memref<1x128xf32, #tpu.memory_space<vmem>>, %arg6: memref<128x8xbf16, #tpu.memory_space<vmem>>, %arg7: memref<1x8xf32, #tpu.memory_space<vmem>>, %arg8: memref<8x8xf32, #tpu.memory_space<vmem>>) attributes {dimension_semantics = [#tpu.dimension_semantics<parallel>], iteration_bounds = array<i64: 1>, scalar_prefetch = 0 : i64, scratch_operands = 0 : i64, tpu.core_type = #tpu.core_type<tc>, window_params = [{transform_indices = @transform_0, window_bounds = array<i64: 8, 6>}, {pipeline_mode = #tpu.pipeline_mode<synchronous>, transform_indices = @transform_1, window_bounds = array<i64: 6, 128>}, {pipeline_mode = #tpu.pipeline_mode<synchronous>, transform_indices = @transform_2, window_bounds = array<i64: 1, 128>}, {pipeline_mode = #tpu.pipeline_mode<synchronous>, transform_indices = @transform_3, window_bounds = array<i64: 128, 128>}, {pipeline_mode = #tpu.pipeline_mode<synchronous>, transform_indices = @transform_4, window_bounds = array<i64: 1, 128>}, {pipeline_mode = #tpu.pipeline_mode<synchronous>, transform_indices = @transform_5, window_bounds = array<i64: 128, 8>}, {pipeline_mode = #tpu.pipeline_mode<synchronous>, transform_indices = @transform_6, window_bounds = array<i64: 1, 8>}, {transform_indices = @transform_7, window_bounds = array<i64: 8, 8>}]} {
    %c0 = arith.constant 0 : index
    %c0_0 = arith.constant 0 : index
    %0 = vector.load %arg1[%c0, %c0_0] : memref<8x6xf32, #tpu.memory_space<vmem>>, vector<8x6xf32>
    %1 = arith.truncf %0 : vector<8x6xf32> to vector<8x6xbf16>
    %c0_1 = arith.constant 0 : index
    %c0_2 = arith.constant 0 : index
    %2 = vector.load %arg2[%c0_1, %c0_2] : memref<6x128xbf16, #tpu.memory_space<vmem>>, vector<6x128xbf16>
    %cst = arith.constant dense<0.000000e+00> : vector<8x128xf32>
    %3 = tpu.matmul %1, %2, %cst {dimension_numbers = #tpu.dot_dimension_numbers<[1], [0], [0], [1], [0, 0, 1, 1], [], []>} : vector<8x6xbf16>, vector<6x128xbf16>, vector<8x128xf32> -> vector<8x128xf32>
    %c0_3 = arith.constant 0 : index
    %c0_4 = arith.constant 0 : index
    %4 = vector.load %arg3[%c0_3, %c0_4] : memref<1x128xf32, #tpu.memory_space<vmem>>, vector<1x128xf32>
    %5 = vector.broadcast %4 : vector<1x128xf32> to vector<8x128xf32>
    %6 = arith.addf %3, %5 : vector<8x128xf32>
    %cst_5 = arith.constant 0.000000e+00 : f32
    %7 = vector.broadcast %cst_5 : f32 to vector<8x128xf32>
    %8 = arith.maximumf %6, %7 : vector<8x128xf32>
    %9 = arith.truncf %8 : vector<8x128xf32> to vector<8x128xbf16>
    %c0_6 = arith.constant 0 : index
    %c0_7 = arith.constant 0 : index
    %10 = vector.load %arg4[%c0_6, %c0_7] : memref<128x128xbf16, #tpu.memory_space<vmem>>, vector<128x128xbf16>
    %cst_8 = arith.constant dense<0.000000e+00> : vector<8x128xf32>
    %11 = tpu.matmul %9, %10, %cst_8 {dimension_numbers = #tpu.dot_dimension_numbers<[1], [0], [0], [1], [0, 0, 1, 1], [], []>} : vector<8x128xbf16>, vector<128x128xbf16>, vector<8x128xf32> -> vector<8x128xf32>
    %c0_9 = arith.constant 0 : index
    %c0_10 = arith.constant 0 : index
    %12 = vector.load %arg5[%c0_9, %c0_10] : memref<1x128xf32, #tpu.memory_space<vmem>>, vector<1x128xf32>
    %13 = vector.broadcast %12 : vector<1x128xf32> to vector<8x128xf32>
    %14 = arith.addf %11, %13 : vector<8x128xf32>
    %cst_11 = arith.constant 0.000000e+00 : f32
    %15 = vector.broadcast %cst_11 : f32 to vector<8x128xf32>
    %16 = arith.maximumf %14, %15 : vector<8x128xf32>
    %17 = arith.addf %16, %8 : vector<8x128xf32>
    %18 = arith.truncf %17 : vector<8x128xf32> to vector<8x128xbf16>
    %c0_12 = arith.constant 0 : index
    %c0_13 = arith.constant 0 : index
    %19 = vector.load %arg6[%c0_12, %c0_13] : memref<128x8xbf16, #tpu.memory_space<vmem>>, vector<128x8xbf16>
    %cst_14 = arith.constant dense<0.000000e+00> : vector<8x8xf32>
    %20 = tpu.matmul %18, %19, %cst_14 {dimension_numbers = #tpu.dot_dimension_numbers<[1], [0], [0], [1], [0, 0, 1, 1], [], []>} : vector<8x128xbf16>, vector<128x8xbf16>, vector<8x8xf32> -> vector<8x8xf32>
    %c0_15 = arith.constant 0 : index
    %c0_16 = arith.constant 0 : index
    %21 = vector.load %arg7[%c0_15, %c0_16] : memref<1x8xf32, #tpu.memory_space<vmem>>, vector<1x8xf32>
    %22 = vector.broadcast %21 : vector<1x8xf32> to vector<8x8xf32>
    %23 = arith.addf %20, %22 : vector<8x8xf32>
    %c0_17 = arith.constant 0 : index
    %c0_18 = arith.constant 0 : index
    %24 = vector.load %arg8[%c0_17, %c0_18] : memref<8x8xf32, #tpu.memory_space<vmem>>, vector<8x8xf32>
    tpu.vector_store %arg8[%c0_17, %c0_18], %23 {strides = array<i32>} : memref<8x8xf32, #tpu.memory_space<vmem>>, vector<8x8xf32>,
    return
  }
  func.func @transform_0(%arg0: i32) -> (i32, i32) {
    %c0_i32 = arith.constant 0 : i32
    %c0_i32_0 = arith.constant 0 : i32
    return %arg0, %c0_i32 : i32, i32
  }
  func.func @transform_1(%arg0: i32) -> (i32, i32) {
    %c0_i32 = arith.constant 0 : i32
    %c0_i32_0 = arith.constant 0 : i32
    %c0_i32_1 = arith.constant 0 : i32
    return %c0_i32, %c0_i32_0 : i32, i32
  }
  func.func @transform_2(%arg0: i32) -> (i32, i32) {
    %c0_i32 = arith.constant 0 : i32
    %c0_i32_0 = arith.constant 0 : i32
    %c0_i32_1 = arith.constant 0 : i32
    return %c0_i32, %c0_i32_0 : i32, i32
  }
  func.func @transform_3(%arg0: i32) -> (i32, i32) {
    %c0_i32 = arith.constant 0 : i32
    %c0_i32_0 = arith.constant 0 : i32
    %c0_i32_1 = arith.constant 0 : i32
    return %c0_i32, %c0_i32_0 : i32, i32
  }
  func.func @transform_4(%arg0: i32) -> (i32, i32) {
    %c0_i32 = arith.constant 0 : i32
    %c0_i32_0 = arith.constant 0 : i32
    %c0_i32_1 = arith.constant 0 : i32
    return %c0_i32, %c0_i32_0 : i32, i32
  }
  func.func @transform_5(%arg0: i32) -> (i32, i32) {
    %c0_i32 = arith.constant 0 : i32
    %c0_i32_0 = arith.constant 0 : i32
    %c0_i32_1 = arith.constant 0 : i32
    return %c0_i32, %c0_i32_0 : i32, i32
  }
  func.func @transform_6(%arg0: i32) -> (i32, i32) {
    %c0_i32 = arith.constant 0 : i32
    %c0_i32_0 = arith.constant 0 : i32
    %c0_i32_1 = arith.constant 0 : i32
    return %c0_i32, %c0_i32_0 : i32, i32
  }
  func.func @transform_7(%arg0: i32) -> (i32, i32) {
    %c0_i32 = arith.constant 0 : i32
    %c0_i32_0 = arith.constant 0 : i32
    return %arg0, %c0_i32 : i32, i32
  }
}

</mosaic_0001>

<llo_original>
// kernel: qnetwork_forward.1
$region0: #{qnetwork_forward.1}
  #allocation0 [shape = 'u32[]', space=smem, size = 0x4, offset = 0x4, fixed_abs, tag = 'smem constant byte address 0x4 - core index']
  #allocation1 [shape = 'u32[72,128]{1,0:T(1,128)}', space=vmem, size = 0x9000, scoped, tag = 'internal scratch']
  %s0 = inlined_call_operand.hbm [shape: f32[8,6], index: 0, kind: input, shape index: {}]
  %s1 = inlined_call_operand.vmem [shape: bf16[6,128], index: 1, kind: input, shape index: {}]
  %s2 = inlined_call_operand.hbm [shape: f32[1,128], index: 2, kind: input, shape index: {}]
  %s3 = inlined_call_operand.vmem [shape: bf16[128,128], index: 3, kind: input, shape index: {}]
  %s4 = inlined_call_operand.hbm [shape: f32[1,128], index: 4, kind: input, shape index: {}]
  %s5 = inlined_call_operand.vmem [shape: bf16[128,8], index: 5, kind: input, shape index: {}]
  %s6 = inlined_call_operand.vmem [shape: f32[1,8], index: 6, kind: input, shape index: {}]
  %s7 = inlined_call_operand.vmem [shape: f32[8,8], index: 7, kind: output, shape index: {}]
  %s8 = sld [smem:[#allocation0]]
  $region50: #{qnetwork_forward.1} parent=0
    _
  %s10 = ssub.s32 1, %s8
  %s11 = scalar_select 0, %s10, %s8
  $region1: #{qnetwork_forward.1} parent=0
    #allocation2 [shape = 'u8[4096]{0}', space=vmem, size = 0x1000, scoped, tag = 'input window, operand 0, single buffered']
    #allocation3 [shape = 's32[1]{0}', space=sflag, size = 0x4, scoped, tag = 'scoped memory for qnetwork_forward.1']
    #allocation4 [shape = 'u8[512]{0}', space=vmem, size = 0x400, scoped, tag = 'input window, operand 2, single buffered']
    #allocation5 [shape = 's32[1]{0}', space=sflag, size = 0x4, scoped, tag = 'scoped memory for qnetwork_forward.1']
    #allocation6 [shape = 'u8[512]{0}', space=vmem, size = 0x400, scoped, tag = 'input window, operand 4, single buffered']
    %12 = vsyncpa [#allocation3], 0
    %13 = vsyncpa [#allocation5], 0
    // Predicated region
    $region2: #{qnetwork_forward.1} parent=1 // pred_check
      _
    $region3: #{qnetwork_forward.1} parent=1 // pred_check_branch
      %15 = sbr.rel (0) target = $region5
    $region4: #{qnetwork_forward.1} parent=1 // pred_region
      %17 = vsyncadd [#allocation3], 0
      %s19 = sshll.u32 %s0, 4
      %s20 = int_to_ptr.hbm [resolvable:$true] %s19
      %s21 = sshll.u32 [#allocation2], 4
      %s22 = int_to_ptr.vmem [resolvable:$true] %s21
      %24 = dma.hbm_to_vmem [thread:$0]  %s20, 128, %s22, [#allocation3]
    $region5: #{qnetwork_forward.1} parent=1 // pred_fallthru
      _
    // Predicated region
    $region6: #{qnetwork_forward.1} parent=1 // pred_check
      _
    $region7: #{qnetwork_forward.1} parent=1 // pred_check_branch
      %26 = sbr.rel (0) target = $region9
    $region8: #{qnetwork_forward.1} parent=1 // pred_region
      _
    $region9: #{qnetwork_forward.1} parent=1 // pred_fallthru
      _
    // Predicated region
    $region10: #{qnetwork_forward.1} parent=1 // pred_check
      _
    $region11: #{qnetwork_forward.1} parent=1 // pred_check_branch
      %28 = sbr.rel (0) target = $region13
    $region12: #{qnetwork_forward.1} parent=1 // pred_region
      %30 = vsyncadd [#allocation5], 0
      %s32 = sshll.u32 %s2, 4
      %s33 = int_to_ptr.hbm [resolvable:$true] %s32
      %s34 = sshll.u32 [#allocation4], 4
      %s35 = int_to_ptr.vmem [resolvable:$true] %s34
      %37 = dma.hbm_to_vmem [thread:$0]  %s33, 16, %s35, [#allocation5]
    $region13: #{qnetwork_forward.1} parent=1 // pred_fallthru
      _
    // Predicated region
    $region14: #{qnetwork_forward.1} parent=1 // pred_check
      _
    $region15: #{qnetwork_forward.1} parent=1 // pred_check_branch
      %39 = sbr.rel (0) target = $region17
    $region16: #{qnetwork_forward.1} parent=1 // pred_region
      _
    $region17: #{qnetwork_forward.1} parent=1 // pred_fallthru
      _
    // Predicated region
    $region18: #{qnetwork_forward.1} parent=1 // pred_check
      _
    $region19: #{qnetwork_forward.1} parent=1 // pred_check_branch
      %41 = sbr.rel (0) target = $region21
    $region20: #{qnetwork_forward.1} parent=1 // pred_region
      %43 = vsyncadd [#allocation5], 0
      %s45 = sshll.u32 %s4, 4
      %s46 = int_to_ptr.hbm [resolvable:$true] %s45
      %s47 = sshll.u32 [#allocation6], 4
      %s48 = int_to_ptr.vmem [resolvable:$true] %s47
      %50 = dma.hbm_to_vmem [thread:$0]  %s46, 16, %s48, [#allocation5]
    $region21: #{qnetwork_forward.1} parent=1 // pred_fallthru
      _
    // Predicated region
    $region22: #{qnetwork_forward.1} parent=1 // pred_check
      _
    $region23: #{qnetwork_forward.1} parent=1 // pred_check_branch
      %52 = sbr.rel (0) target = $region25
    $region24: #{qnetwork_forward.1} parent=1 // pred_region
      _
    $region25: #{qnetwork_forward.1} parent=1 // pred_fallthru
      _
    // Predicated region
    $region26: #{qnetwork_forward.1} parent=1 // pred_check
      _
    $region27: #{qnetwork_forward.1} parent=1 // pred_check_branch
      %54 = sbr.rel (0) target = $region29
    $region28: #{qnetwork_forward.1} parent=1 // pred_region
      _
    $region29: #{qnetwork_forward.1} parent=1 // pred_fallthru
      _
    // Predicated region
    $region30: #{qnetwork_forward.1} parent=1 // pred_check
      _
    $region31: #{qnetwork_forward.1} parent=1 // pred_check_branch
      %56 = sbr.rel (0) target = $region33
    $region32: #{qnetwork_forward.1} parent=1 // pred_region
      %58 = dma.done [#allocation3], 128
    $region33: #{qnetwork_forward.1} parent=1 // pred_fallthru
      _
    // Predicated region
    $region34: #{qnetwork_forward.1} parent=1 // pred_check
      _
    $region35: #{qnetwork_forward.1} parent=1 // pred_check_branch
      %60 = sbr.rel (0) target = $region37
    $region36: #{qnetwork_forward.1} parent=1 // pred_region
      %62 = dma.done [#allocation5], 16
    $region37: #{qnetwork_forward.1} parent=1 // pred_fallthru
      _
    // Predicated region
    $region38: #{qnetwork_forward.1} parent=1 // pred_check
      _
    $region39: #{qnetwork_forward.1} parent=1 // pred_check_branch
      %64 = sbr.rel (0) target = $region41
    $region40: #{qnetwork_forward.1} parent=1 // pred_region
      %66 = dma.done [#allocation5], 16
    $region41: #{qnetwork_forward.1} parent=1 // pred_fallthru
      _
    %v68 = vld [vmem:[#allocation2] sm:$0xff]
    %v69 = vpack.c.bf16 %v68, %v68
    %v70 = vld [vmem:[%s1] sm:$0x7]
    %v71 = vld [vmem:[#allocation4] sm:$0x1]
    %v73 = vperm.slane %v71, 0
    %vm75 = vcmask 48128
    %v77 = vsel %vm75, %v69, 0
    %vm79 = vcmask 1042432
    %v81 = vsel %vm79, %v70, 0
    %83 = vmatpush.bf16.msra.mxu0 0
    %84 = vmatpush.bf16.msra.mxu0 0
    %85 = vmatpush.bf16.msra.mxu0 0
    %86 = vmatpush.bf16.msra.mxu0 0
    %87 = vmatpush.bf16.msra.mxu0 0
    %88 = vmatpush.bf16.msra.mxu0 0
    %89 = vmatpush.bf16.msra.mxu0 0
    %90 = vmatpush.bf16.msra.mxu0 %v81
    %91 = vmatmul.bf16.gmra.mxu0 %v77
    %v92 = vpop.f32.mrf.mxu0
    %v93 = vadd.f32 %v73, %v92
    %v94 = vpop.f32.mrf.mxu0
    %95 = vdwg.mxu0
    %v96 = vmax.f32 %v93, 0.0
    %v97 = vpack.c.bf16 %v96, %v96
    %v98 = vld [vmem:[%s3] sm:$0xf]
    %v99 = vld [vmem:[%s3 + $0x4] sm:$0xf]
    %v100 = vld [vmem:[%s3 + $0x8] sm:$0xf]
    %v101 = vld [vmem:[%s3 + $0xc] sm:$0xf]
    %v102 = vld [vmem:[%s3 + $0x10] sm:$0xf]
    %v103 = vld [vmem:[%s3 + $0x14] sm:$0xf]
    %v104 = vld [vmem:[%s3 + $0x18] sm:$0xf]
    %v105 = vld [vmem:[%s3 + $0x1c] sm:$0xf]
    %v106 = vld [vmem:[%s3 + $0x20] sm:$0xf]
    %v107 = vld [vmem:[%s3 + $0x24] sm:$0xf]
    %v108 = vld [vmem:[%s3 + $0x28] sm:$0xf]
    %v109 = vld [vmem:[%s3 + $0x2c] sm:$0xf]
    %v110 = vld [vmem:[%s3 + $0x30] sm:$0xf]
    %v111 = vld [vmem:[%s3 + $0x34] sm:$0xf]
    %v112 = vld [vmem:[%s3 + $0x38] sm:$0xf]
    %v113 = vld [vmem:[%s3 + $0x3c] sm:$0xf]
    %v114 = vld [vmem:[#allocation6] sm:$0x1]
    %v116 = vperm.slane %v114, 0
    %v134 = vunpack.c.l.b16 %v98
    %v135 = vunpack.c.l.b16 %v99
    %v136 = vunpack.c.l.b16 %v100
    %v137 = vunpack.c.l.b16 %v101
    %v138 = vunpack.c.l.b16 %v102
    %v139 = vunpack.c.l.b16 %v103
    %v140 = vunpack.c.l.b16 %v104
    %v141 = vunpack.c.l.b16 %v105
    %v142 = vunpack.c.l.b16 %v106
    %v143 = vunpack.c.l.b16 %v107
    %v144 = vunpack.c.l.b16 %v108
    %v145 = vunpack.c.l.b16 %v109
    %v146 = vunpack.c.l.b16 %v110
    %v147 = vunpack.c.l.b16 %v111
    %v148 = vunpack.c.l.b16 %v112
    %v149 = vunpack.c.l.b16 %v113
    %v150 = vpack.c.b16 %v135, %v134
    %v151 = vpack.c.b16 %v137, %v136
    %v152 = vpack.c.b16 %v139, %v138
    %v153 = vpack.c.b16 %v141, %v140
    %v154 = vpack.c.b16 %v143, %v142
    %v155 = vpack.c.b16 %v145, %v144
    %v156 = vpack.c.b16 %v147, %v146
    %v157 = vpack.c.b16 %v149, %v148
    %166 = vmatpush.bf16.msra.mxu0 %v157
    %167 = vmatpush.bf16.msra.mxu0 %v156
    %168 = vmatpush.bf16.msra.mxu0 %v155
    %169 = vmatpush.bf16.msra.mxu0 %v154
    %170 = vmatpush.bf16.msra.mxu0 %v153
    %171 = vmatpush.bf16.msra.mxu0 %v152
    %172 = vmatpush.bf16.msra.mxu0 %v151
    %173 = vmatpush.bf16.msra.mxu0 %v150
    %174 = vmatmul.bf16.gmra.mxu0 %v97
    %v175 = vpop.f32.mrf.mxu0
    %v176 = vadd.f32 %v116, %v175
    %v177 = vpop.f32.mrf.mxu0
    %178 = vdwg.mxu0
    %v179 = vmax.f32 %v176, 0.0
    %v180 = vadd.f32 %v179, %v96
    %v181 = vpack.c.bf16 %v180, %v180
    %v182 = vld [vmem:[%s5] sm:$0xf]
    %v183 = vld [vmem:[%s5 + $0x4] sm:$0xf]
    %v184 = vld [vmem:[%s5 + $0x8] sm:$0xf]
    %v185 = vld [vmem:[%s5 + $0xc] sm:$0xf]
    %v186 = vld [vmem:[%s5 + $0x10] sm:$0xf]
    %v187 = vld [vmem:[%s5 + $0x14] sm:$0xf]
    %v188 = vld [vmem:[%s5 + $0x18] sm:$0xf]
    %v189 = vld [vmem:[%s5 + $0x1c] sm:$0xf]
    %v190 = vld [vmem:[%s5 + $0x20] sm:$0xf]
    %v191 = vld [vmem:[%s5 + $0x24] sm:$0xf]
    %v192 = vld [vmem:[%s5 + $0x28] sm:$0xf]
    %v193 = vld [vmem:[%s5 + $0x2c] sm:$0xf]
    %v194 = vld [vmem:[%s5 + $0x30] sm:$0xf]
    %v195 = vld [vmem:[%s5 + $0x34] sm:$0xf]
    %v196 = vld [vmem:[%s5 + $0x38] sm:$0xf]
    %v197 = vld [vmem:[%s5 + $0x3c] sm:$0xf]
    %v198 = vld [vmem:[%s6] sm:$0x1]
    %v200 = vperm.slane %v198, 0
    %v218 = vunpack.c.l.b16 %v182
    %v219 = vunpack.c.l.b16 %v183
    %v220 = vunpack.c.l.b16 %v184
    %v221 = vunpack.c.l.b16 %v185
    %v222 = vunpack.c.l.b16 %v186
    %v223 = vunpack.c.l.b16 %v187
    %v224 = vunpack.c.l.b16 %v188
    %v225 = vunpack.c.l.b16 %v189
    %v226 = vunpack.c.l.b16 %v190
    %v227 = vunpack.c.l.b16 %v191
    %v228 = vunpack.c.l.b16 %v192
    %v229 = vunpack.c.l.b16 %v193
    %v230 = vunpack.c.l.b16 %v194
    %v231 = vunpack.c.l.b16 %v195
    %v232 = vunpack.c.l.b16 %v196
    %v233 = vunpack.c.l.b16 %v197
    %v234 = vpack.c.b16 %v219, %v218
    %v235 = vpack.c.b16 %v221, %v220
    %v236 = vpack.c.b16 %v223, %v222
    %v237 = vpack.c.b16 %v225, %v224
    %v238 = vpack.c.b16 %v227, %v226
    %v239 = vpack.c.b16 %v229, %v228
    %v240 = vpack.c.b16 %v231, %v230
    %v241 = vpack.c.b16 %v233, %v232
    %250 = vmatpush.bf16.msra.mxu0 %v241
    %251 = vmatpush.bf16.msra.mxu0 %v240
    %252 = vmatpush.bf16.msra.mxu0 %v239
    %253 = vmatpush.bf16.msra.mxu0 %v238
    %254 = vmatpush.bf16.msra.mxu0 %v237
    %255 = vmatpush.bf16.msra.mxu0 %v236
    %256 = vmatpush.bf16.msra.mxu0 %v235
    %257 = vmatpush.bf16.msra.mxu0 %v234
    %258 = vmatmul.bf16.gmra.mxu0 %v181
    %v259 = vpop.f32.mrf.mxu0
    %v260 = vadd.f32 %v200, %v259
    %v261 = vpop.f32.mrf.mxu0
    %262 = vdwg.mxu0
    %vm263 = vcmask 64512
    %264 = vst.msk [vmem:[%s7] sm:$0xff] %vm263, %v260
    // Predicated region
    $region42: #{qnetwork_forward.1} parent=1 // pred_check
      _
    $region43: #{qnetwork_forward.1} parent=1 // pred_check_branch
      %266 = sbr.rel (0) target = $region45
    $region44: #{qnetwork_forward.1} parent=1 // pred_region
      _
    $region45: #{qnetwork_forward.1} parent=1 // pred_fallthru
      _
    // Predicated region
    $region46: #{qnetwork_forward.1} parent=1 // pred_check
      _
    $region47: #{qnetwork_forward.1} parent=1 // pred_check_branch
      %268 = sbr.rel (0) target = $region49
    $region48: #{qnetwork_forward.1} parent=1 // pred_region
      _
    $region49: #{qnetwork_forward.1} parent=1 // pred_fallthru
      _
    %269 = vsyncpa [#allocation3], 1
    %270 = vsyncpa [#allocation5], 1

</llo_original>
